<compile_context>
chip_gen: v5e
topology: v5e:2x2
jax: 0.10.0
libtpu: 0.0.40
codegen_flags: <defaults>
</compile_context>

<pallas_src>
import functools

import jax
import jax.numpy as jnp
from jax.experimental import pallas as pl
from jax.experimental.pallas import tpu as pltpu

# Module defaults
PATCH_SIZE = 16
NUM_CHANNELS = 3
HIDDEN_SIZE = 32
ALPHA = 0.999
INIT_MEAN = 0.0
INIT_VAR = 0.004
LANE = 128


def _round_up(x, m):
    return (x + m - 1) // m * m


# ----------------------------- Pallas kernel ------------------------------ #
def _patch_embed_kernel(x_ref, w_ref, b_ref, ws_ref, a_ref, c_ref, o_ref):
    # x_ref : (tile_n, K)  bf16  raw (un-normalized) patch rows
    # w_ref : (K, Dp)      bf16  reshaped conv weight, zero-padded to 128 lanes
    # b_ref : (1, Dp)      f32   bias (padded)
    # ws_ref: (1, Dp)      f32   column-sum of the weight (padded)
    # a_ref : (tile_n, 1)  f32   per-row inv_std
    # c_ref : (tile_n, 1)  f32   per-row mean * inv_std
    # o_ref : (tile_n, Dp) f32
    acc = jnp.dot(x_ref[...], w_ref[...], preferred_element_type=jnp.float32)
    out = acc * a_ref[...] - c_ref[...] * ws_ref[...] + b_ref[...]
    o_ref[...] = out.astype(o_ref.dtype)


def patch_embed_matmul(patches, w_kd, bias_pd, wsum_pd, a_rows, c_rows, *, tile_n):
    """patches: (N_pad, K) bf16, w_kd: (K, Dp) bf16, bias/wsum: (1, Dp) f32,
    a_rows/c_rows: (N_pad, 1) f32  ->  (N_pad, Dp) f32."""
    N, K = patches.shape
    _, Dp = w_kd.shape
    assert N % tile_n == 0
    grid = (N // tile_n,)
    return pl.pallas_call(
        _patch_embed_kernel,
        out_shape=jax.ShapeDtypeStruct((N, Dp), jnp.float32),
        grid=grid,
        in_specs=[
            pl.BlockSpec((tile_n, K), lambda i: (i, 0)),
            pl.BlockSpec((K, Dp), lambda i: (0, 0)),
            pl.BlockSpec((1, Dp), lambda i: (0, 0)),
            pl.BlockSpec((1, Dp), lambda i: (0, 0)),
            pl.BlockSpec((tile_n, 1), lambda i: (i, 0)),
            pl.BlockSpec((tile_n, 1), lambda i: (i, 0)),
        ],
        out_specs=pl.BlockSpec((tile_n, Dp), lambda i: (i, 0)),
        compiler_params=pltpu.CompilerParams(
            dimension_semantics=("parallel",),
            vmem_limit_bytes=32 * 1024 * 1024,
        ),
    )(patches, w_kd, bias_pd, wsum_pd, a_rows, c_rows)


# ------------------------------ JAX glue ----------------------------------- #
def _running_norm_stats(images, dyn_mean, dyn_var, alpha=ALPHA):
    """EMA of per-image mean/var (biased var, like np.var), sequential over the
    batch — returns the per-image (post-update) stats plus the final state."""
    per_mean = jnp.mean(images, axis=(1, 2, 3))
    per_var = jnp.var(images, axis=(1, 2, 3))

    def step(carry, mv):
        dm, dv = carry
        m, v = mv
        dm = alpha * dm + (1.0 - alpha) * m
        dv = alpha * dv + (1.0 - alpha) * v
        return (dm, dv), (dm, dv)

    (dm_f, dv_f), (dms, dvs) = jax.lax.scan(step, (dyn_mean, dyn_var),
                                            (per_mean, per_var))
    return dms, dvs, dm_f, dv_f


def _extract_patches_bf16(images_nchw, patch_size):
    """(B, C, H, W) -> (B*HP*WP, C*P*P) bf16, channel-major within a patch
    (matches nn.Conv2d weight layout (D, C, P, P)). Cast to bf16 BEFORE the
    relayout so the transpose writes half the bytes; stays inside the jit so
    XLA fuses it with the surrounding ops."""
    B, C, H, W = images_nchw.shape
    P = patch_size
    HP, WP = H // P, W // P
    x = images_nchw.astype(jnp.bfloat16)
    x = x.reshape(B, C, HP, P, WP, P).transpose(0, 2, 4, 1, 3, 5)
    return x.reshape(B * HP * WP, C * P * P), (B, HP, WP)


@functools.partial(jax.jit, static_argnames=("tile_n",))
def vision_embeddings_forward(images_nchw, conv_weight, conv_bias,
                              dyn_mean, dyn_var, *, tile_n=512):
    """images_nchw: (B, C, H, W) f32
       conv_weight: (D, C, P, P) f32   (nn.Conv2d weight)
       conv_bias:   (D,) f32
       dyn_mean/dyn_var: running-stat state (scalars)
       returns:     ((B, H/P, W/P, D) f32, new_mean, new_var)"""
    D, C, P, _ = conv_weight.shape
    B, _, H, W = images_nchw.shape
    HP, WP = H // P, W // P
    N = B * HP * WP
    K = C * P * P
    Dp = _round_up(D, LANE)

    # Running stats + per-row affine-fold parameters.
    dms, dvs, new_mean, new_var = _running_norm_stats(images_nchw, dyn_mean, dyn_var)
    inv_s = 1.0 / (jnp.sqrt(dvs) + 1e-5)                      # (B,)
    patches_per_img = HP * WP
    a_rows = jnp.repeat(inv_s, patches_per_img).reshape(N, 1).astype(jnp.float32)
    c_rows = jnp.repeat(dms * inv_s, patches_per_img).reshape(N, 1).astype(jnp.float32)

    # Raw bf16 patches, padded up to a multiple of the row tile.
    patches, _ = _extract_patches_bf16(images_nchw, P)
    tile = min(tile_n, _round_up(N, 8))
    n_pad = _round_up(N, tile)
    if n_pad != N:
        patches = jnp.pad(patches, ((0, n_pad - N), (0, 0)))
        a_rows = jnp.pad(a_rows, ((0, n_pad - N), (0, 0)))
        c_rows = jnp.pad(c_rows, ((0, n_pad - N), (0, 0)))

    # Weight (D, C, P, P) -> (K, Dp): lane-dense zero pad to 128 output lanes.
    w_kd = conv_weight.reshape(D, K).T.astype(jnp.float32)    # (K, D)
    wsum_pd = jnp.pad(jnp.sum(w_kd, axis=0, keepdims=True), ((0, 0), (0, Dp - D)))
    w_kd = jnp.pad(w_kd, ((0, 0), (0, Dp - D))).astype(jnp.bfloat16)
    bias_pd = jnp.pad(conv_bias.reshape(1, D).astype(jnp.float32),
                      ((0, 0), (0, Dp - D)))

    out = patch_embed_matmul(patches, w_kd, bias_pd, wsum_pd, a_rows, c_rows,
                             tile_n=tile)
    out = out[:N, :D].reshape(B, HP, WP, D)                   # hidden-last layout
    return out, new_mean, new_var


# -------------------------------- main ------------------------------------- #
if __name__ == "__main__":
    key = jax.random.PRNGKey(0)
    k_img, k_w, k_b = jax.random.split(key, 3)

    B, C, H, W = 2, NUM_CHANNELS, 32, 32          # two 32x32 RGB images
    images = jax.random.uniform(k_img, (B, C, H, W), dtype=jnp.float32)

    D, P = HIDDEN_SIZE, PATCH_SIZE
    fan_in = C * P * P
    bound = float(1.0 / (fan_in ** 0.5))
    conv_weight = jax.random.uniform(
        k_w, (D, C, P, P), dtype=jnp.float32, minval=-bound, maxval=bound)
    conv_bias = jax.random.uniform(
        k_b, (D,), dtype=jnp.float32, minval=-bound, maxval=bound)

    out, new_m, new_v = vision_embeddings_forward(
        images, conv_weight, conv_bias,
        jnp.float32(INIT_MEAN), jnp.float32(INIT_VAR))
    out = jax.block_until_ready(out)

    # Reference: module semantics in plain f32 JAX (normalize -> strided conv
    # -> hidden-last transpose), sequential running stats over the batch.
    dm = jnp.float32(INIT_MEAN)
    dv = jnp.float32(INIT_VAR)
    imgs_n = []
    for b in range(B):
        img = images[b]
        dm = ALPHA * dm + (1.0 - ALPHA) * jnp.mean(img)
        dv = ALPHA * dv + (1.0 - ALPHA) * jnp.var(img)
        imgs_n.append((img - dm) / (jnp.sqrt(dv) + 1e-5))
    imgs_n = jnp.stack(imgs_n)
    ref = jax.lax.conv_general_dilated(
        imgs_n, conv_weight, window_strides=(P, P), padding="VALID",
        dimension_numbers=("NCHW", "OIHW", "NCHW"))
    ref = ref + conv_bias[None, :, None, None]
    ref = jnp.transpose(ref, (0, 2, 3, 1))                     # (B, HP, WP, D)

    assert out.shape == (B, H // P, W // P, D), out.shape
    # bf16 matmul inputs w/ f32 accumulation vs exact f32 reference.
    assert jnp.allclose(out, ref, atol=5e-2, rtol=2e-2), float(
        jnp.max(jnp.abs(out - ref)))
    # Running-stats state is preserved/returned correctly.
    assert jnp.allclose(new_m, dm, atol=1e-6)
    assert jnp.allclose(new_v, dv, atol=1e-6)

    print("KERNEL_OK")
</pallas_src>

<mosaic_0001>
module attributes {stable_mosaic.version = 11 : i64} {
  func.func @_patch_embed_kernel(%arg0: i32, %arg1: memref<8x768xbf16, #tpu.memory_space<vmem>>, %arg2: memref<768x128xbf16, #tpu.memory_space<vmem>>, %arg3: memref<1x128xf32, #tpu.memory_space<vmem>>, %arg4: memref<1x128xf32, #tpu.memory_space<vmem>>, %arg5: memref<8x1xf32, #tpu.memory_space<vmem>>, %arg6: memref<8x1xf32, #tpu.memory_space<vmem>>, %arg7: memref<8x128xf32, #tpu.memory_space<vmem>>) attributes {dimension_semantics = [#tpu.dimension_semantics<parallel>], iteration_bounds = array<i64: 1>, scalar_prefetch = 0 : i64, scratch_operands = 0 : i64, tpu.core_type = #tpu.core_type<tc>, window_params = [{transform_indices = @transform_0, window_bounds = array<i64: 8, 768>}, {pipeline_mode = #tpu.pipeline_mode<synchronous>, transform_indices = @transform_1, window_bounds = array<i64: 768, 128>}, {pipeline_mode = #tpu.pipeline_mode<synchronous>, transform_indices = @transform_2, window_bounds = array<i64: 1, 128>}, {pipeline_mode = #tpu.pipeline_mode<synchronous>, transform_indices = @transform_3, window_bounds = array<i64: 1, 128>}, {transform_indices = @transform_4, window_bounds = array<i64: 8, 1>}, {transform_indices = @transform_5, window_bounds = array<i64: 8, 1>}, {transform_indices = @transform_6, window_bounds = array<i64: 8, 128>}]} {
    %c0 = arith.constant 0 : index
    %c0_0 = arith.constant 0 : index
    %0 = vector.load %arg1[%c0, %c0_0] : memref<8x768xbf16, #tpu.memory_space<vmem>>, vector<8x768xbf16>
    %c0_1 = arith.constant 0 : index
    %c0_2 = arith.constant 0 : index
    %1 = vector.load %arg2[%c0_1, %c0_2] : memref<768x128xbf16, #tpu.memory_space<vmem>>, vector<768x128xbf16>
    %cst = arith.constant dense<0.000000e+00> : vector<8x128xf32>
    %2 = tpu.matmul %0, %1, %cst {dimension_numbers = #tpu.dot_dimension_numbers<[1], [0], [0], [1], [0, 0, 1, 1], [], []>} : vector<8x768xbf16>, vector<768x128xbf16>, vector<8x128xf32> -> vector<8x128xf32>
    %c0_3 = arith.constant 0 : index
    %c0_4 = arith.constant 0 : index
    %3 = vector.load %arg5[%c0_3, %c0_4] : memref<8x1xf32, #tpu.memory_space<vmem>>, vector<8x1xf32>
    %4 = vector.broadcast %3 : vector<8x1xf32> to vector<8x128xf32>
    %5 = arith.mulf %2, %4 : vector<8x128xf32>
    %c0_5 = arith.constant 0 : index
    %c0_6 = arith.constant 0 : index
    %6 = vector.load %arg6[%c0_5, %c0_6] : memref<8x1xf32, #tpu.memory_space<vmem>>, vector<8x1xf32>
    %c0_7 = arith.constant 0 : index
    %c0_8 = arith.constant 0 : index
    %7 = vector.load %arg4[%c0_7, %c0_8] : memref<1x128xf32, #tpu.memory_space<vmem>>, vector<1x128xf32>
    %8 = vector.broadcast %6 : vector<8x1xf32> to vector<8x128xf32>
    %9 = vector.broadcast %7 : vector<1x128xf32> to vector<8x128xf32>
    %10 = arith.mulf %8, %9 : vector<8x128xf32>
    %11 = arith.subf %5, %10 : vector<8x128xf32>
    %c0_9 = arith.constant 0 : index
    %c0_10 = arith.constant 0 : index
    %12 = vector.load %arg3[%c0_9, %c0_10] : memref<1x128xf32, #tpu.memory_space<vmem>>, vector<1x128xf32>
    %13 = vector.broadcast %12 : vector<1x128xf32> to vector<8x128xf32>
    %14 = arith.addf %11, %13 : vector<8x128xf32>
    %c0_11 = arith.constant 0 : index
    %c0_12 = arith.constant 0 : index
    %15 = vector.load %arg7[%c0_11, %c0_12] : memref<8x128xf32, #tpu.memory_space<vmem>>, vector<8x128xf32>
    tpu.vector_store %arg7[%c0_11, %c0_12], %14 {strides = array<i32>} : memref<8x128xf32, #tpu.memory_space<vmem>>, vector<8x128xf32>,
    return
  }
  func.func @transform_0(%arg0: i32) -> (i32, i32) {
    %c0_i32 = arith.constant 0 : i32
    %c0_i32_0 = arith.constant 0 : i32
    return %arg0, %c0_i32 : i32, i32
  }
  func.func @transform_1(%arg0: i32) -> (i32, i32) {
    %c0_i32 = arith.constant 0 : i32
    %c0_i32_0 = arith.constant 0 : i32
    %c0_i32_1 = arith.constant 0 : i32
    return %c0_i32, %c0_i32_0 : i32, i32
  }
  func.func @transform_2(%arg0: i32) -> (i32, i32) {
    %c0_i32 = arith.constant 0 : i32
    %c0_i32_0 = arith.constant 0 : i32
    %c0_i32_1 = arith.constant 0 : i32
    return %c0_i32, %c0_i32_0 : i32, i32
  }
  func.func @transform_3(%arg0: i32) -> (i32, i32) {
    %c0_i32 = arith.constant 0 : i32
    %c0_i32_0 = arith.constant 0 : i32
    %c0_i32_1 = arith.constant 0 : i32
    return %c0_i32, %c0_i32_0 : i32, i32
  }
  func.func @transform_4(%arg0: i32) -> (i32, i32) {
    %c0_i32 = arith.constant 0 : i32
    %c0_i32_0 = arith.constant 0 : i32
    return %arg0, %c0_i32 : i32, i32
  }
  func.func @transform_5(%arg0: i32) -> (i32, i32) {
    %c0_i32 = arith.constant 0 : i32
    %c0_i32_0 = arith.constant 0 : i32
    return %arg0, %c0_i32 : i32, i32
  }
  func.func @transform_6(%arg0: i32) -> (i32, i32) {
    %c0_i32 = arith.constant 0 : i32
    %c0_i32_0 = arith.constant 0 : i32
    return %arg0, %c0_i32 : i32, i32
  }
}

</mosaic_0001>

<llo_original>
// kernel: custom-call
$region0: #{custom-call}
  %s0 = inlined_call_operand.vmem [shape: f32[2], index: 0, kind: output, shape index: {}]

// kernel: vision_embeddings_forward.1
$region0: #{vision_embeddings_forward.1}
  #allocation0 [shape = 'u32[]', space=smem, size = 0x4, offset = 0x4, fixed_abs, tag = 'smem constant byte address 0x4 - core index']
  #allocation1 [shape = 'u32[72,128]{1,0:T(1,128)}', space=vmem, size = 0x9000, scoped, tag = 'internal scratch']
  %s0 = inlined_call_operand.vmem [shape: bf16[8,768], index: 0, kind: input, shape index: {}]
  %s1 = inlined_call_operand.vmem [shape: bf16[768,128], index: 1, kind: input, shape index: {}]
  %s2 = inlined_call_operand.vmem [shape: f32[1,128], index: 2, kind: input, shape index: {}]
  %s3 = inlined_call_operand.vmem [shape: f32[1,128], index: 3, kind: input, shape index: {}]
  %s4 = inlined_call_operand.vmem [shape: f32[8,1], index: 4, kind: input, shape index: {}]
  %s5 = inlined_call_operand.vmem [shape: f32[8,1], index: 5, kind: input, shape index: {}]
  %s6 = inlined_call_operand.hbm [shape: f32[8,128], index: 6, kind: output, shape index: {}]
  %s7 = sld [smem:[#allocation0]]
  $region34: #{vision_embeddings_forward.1} parent=0
    _
  %s9 = ssub.s32 1, %s7
  %s10 = scalar_select 0, %s9, %s7
  $region1: #{vision_embeddings_forward.1} parent=0
    #allocation2 [shape = 'u8[4096]{0}', space=vmem, size = 0x1000, scoped, tag = 'output window, operand 0, single buffered']
    #allocation3 [shape = 's32[1]{0}', space=sflag, size = 0x4, scoped, tag = 'scoped memory for vision_embeddings_forward.1']
    %11 = vsyncpa [#allocation3], 0
    // Predicated region
    $region2: #{vision_embeddings_forward.1} parent=1 // pred_check
      _
    $region3: #{vision_embeddings_forward.1} parent=1 // pred_check_branch
      %13 = sbr.rel (0) target = $region5
    $region4: #{vision_embeddings_forward.1} parent=1 // pred_region
      _
    $region5: #{vision_embeddings_forward.1} parent=1 // pred_fallthru
      _
    // Predicated region
    $region6: #{vision_embeddings_forward.1} parent=1 // pred_check
      _
    $region7: #{vision_embeddings_forward.1} parent=1 // pred_check_branch
      %15 = sbr.rel (0) target = $region9
    $region8: #{vision_embeddings_forward.1} parent=1 // pred_region
      _
    $region9: #{vision_embeddings_forward.1} parent=1 // pred_fallthru
      _
    // Predicated region
    $region10: #{vision_embeddings_forward.1} parent=1 // pred_check
      _
    $region11: #{vision_embeddings_forward.1} parent=1 // pred_check_branch
      %17 = sbr.rel (0) target = $region13
    $region12: #{vision_embeddings_forward.1} parent=1 // pred_region
      _
    $region13: #{vision_embeddings_forward.1} parent=1 // pred_fallthru
      _
    // Predicated region
    $region14: #{vision_embeddings_forward.1} parent=1 // pred_check
      _
    $region15: #{vision_embeddings_forward.1} parent=1 // pred_check_branch
      %19 = sbr.rel (0) target = $region17
    $region16: #{vision_embeddings_forward.1} parent=1 // pred_region
      _
    $region17: #{vision_embeddings_forward.1} parent=1 // pred_fallthru
      _
    // Predicated region
    $region18: #{vision_embeddings_forward.1} parent=1 // pred_check
      _
    $region19: #{vision_embeddings_forward.1} parent=1 // pred_check_branch
      %21 = sbr.rel (0) target = $region21
    $region20: #{vision_embeddings_forward.1} parent=1 // pred_region
      _
    $region21: #{vision_embeddings_forward.1} parent=1 // pred_fallthru
      _
    // Predicated region
    $region22: #{vision_embeddings_forward.1} parent=1 // pred_check
      _
    $region23: #{vision_embeddings_forward.1} parent=1 // pred_check_branch
      %23 = sbr.rel (0) target = $region25
    $region24: #{vision_embeddings_forward.1} parent=1 // pred_region
      _
    $region25: #{vision_embeddings_forward.1} parent=1 // pred_fallthru
      _
    %v24 = vld [vmem:[%s0] sm:$0xff]
    %v25 = vld [vmem:[%s0 + $0x8] sm:$0xff]
    %v26 = vld [vmem:[%s0 + $0x10] sm:$0xff]
    %v27 = vld [vmem:[%s1] sm:$0xf]
    %v28 = vld [vmem:[%s1 + $0x4] sm:$0xf]
    %v29 = vld [vmem:[%s1 + $0x8] sm:$0xf]
    %v30 = vld [vmem:[%s1 + $0xc] sm:$0xf]
    %v31 = vld [vmem:[%s1 + $0x10] sm:$0xf]
    %v32 = vld [vmem:[%s1 + $0x14] sm:$0xf]
    %v33 = vld [vmem:[%s1 + $0x18] sm:$0xf]
    %v34 = vld [vmem:[%s1 + $0x1c] sm:$0xf]
    %v35 = vld [vmem:[%s1 + $0x20] sm:$0xf]
    %v36 = vld [vmem:[%s1 + $0x24] sm:$0xf]
    %v37 = vld [vmem:[%s1 + $0x28] sm:$0xf]
    %v38 = vld [vmem:[%s1 + $0x2c] sm:$0xf]
    %v39 = vld [vmem:[%s1 + $0x30] sm:$0xf]
    %v40 = vld [vmem:[%s1 + $0x34] sm:$0xf]
    %v41 = vld [vmem:[%s1 + $0x38] sm:$0xf]
    %v42 = vld [vmem:[%s1 + $0x3c] sm:$0xf]
    %v43 = vld [vmem:[%s1 + $0x40] sm:$0xf]
    %v44 = vld [vmem:[%s1 + $0x44] sm:$0xf]
    %v45 = vld [vmem:[%s1 + $0x48] sm:$0xf]
    %v46 = vld [vmem:[%s1 + $0x4c] sm:$0xf]
    %v47 = vld [vmem:[%s1 + $0x50] sm:$0xf]
    %v48 = vld [vmem:[%s1 + $0x54] sm:$0xf]
    %v49 = vld [vmem:[%s1 + $0x58] sm:$0xf]
    %v50 = vld [vmem:[%s1 + $0x5c] sm:$0xf]
    %v51 = vld [vmem:[%s1 + $0x60] sm:$0xf]
    %v52 = vld [vmem:[%s1 + $0x64] sm:$0xf]
    %v53 = vld [vmem:[%s1 + $0x68] sm:$0xf]
    %v54 = vld [vmem:[%s1 + $0x6c] sm:$0xf]
    %v55 = vld [vmem:[%s1 + $0x70] sm:$0xf]
    %v56 = vld [vmem:[%s1 + $0x74] sm:$0xf]
    %v57 = vld [vmem:[%s1 + $0x78] sm:$0xf]
    %v58 = vld [vmem:[%s1 + $0x7c] sm:$0xf]
    %v59 = vld [vmem:[%s1 + $0x80] sm:$0xf]
    %v60 = vld [vmem:[%s1 + $0x84] sm:$0xf]
    %v61 = vld [vmem:[%s1 + $0x88] sm:$0xf]
    %v62 = vld [vmem:[%s1 + $0x8c] sm:$0xf]
    %v63 = vld [vmem:[%s1 + $0x90] sm:$0xf]
    %v64 = vld [vmem:[%s1 + $0x94] sm:$0xf]
    %v65 = vld [vmem:[%s1 + $0x98] sm:$0xf]
    %v66 = vld [vmem:[%s1 + $0x9c] sm:$0xf]
    %v67 = vld [vmem:[%s1 + $0xa0] sm:$0xf]
    %v68 = vld [vmem:[%s1 + $0xa4] sm:$0xf]
    %v69 = vld [vmem:[%s1 + $0xa8] sm:$0xf]
    %v70 = vld [vmem:[%s1 + $0xac] sm:$0xf]
    %v71 = vld [vmem:[%s1 + $0xb0] sm:$0xf]
    %v72 = vld [vmem:[%s1 + $0xb4] sm:$0xf]
    %v73 = vld [vmem:[%s1 + $0xb8] sm:$0xf]
    %v74 = vld [vmem:[%s1 + $0xbc] sm:$0xf]
    %v75 = vld [vmem:[%s1 + $0xc0] sm:$0xf]
    %v76 = vld [vmem:[%s1 + $0xc4] sm:$0xf]
    %v77 = vld [vmem:[%s1 + $0xc8] sm:$0xf]
    %v78 = vld [vmem:[%s1 + $0xcc] sm:$0xf]
    %v79 = vld [vmem:[%s1 + $0xd0] sm:$0xf]
    %v80 = vld [vmem:[%s1 + $0xd4] sm:$0xf]
    %v81 = vld [vmem:[%s1 + $0xd8] sm:$0xf]
    %v82 = vld [vmem:[%s1 + $0xdc] sm:$0xf]
    %v83 = vld [vmem:[%s1 + $0xe0] sm:$0xf]
    %v84 = vld [vmem:[%s1 + $0xe4] sm:$0xf]
    %v85 = vld [vmem:[%s1 + $0xe8] sm:$0xf]
    %v86 = vld [vmem:[%s1 + $0xec] sm:$0xf]
    %v87 = vld [vmem:[%s1 + $0xf0] sm:$0xf]
    %v88 = vld [vmem:[%s1 + $0xf4] sm:$0xf]
    %v89 = vld [vmem:[%s1 + $0xf8] sm:$0xf]
    %v90 = vld [vmem:[%s1 + $0xfc] sm:$0xf]
    %v91 = vld [vmem:[%s1 + $0x100] sm:$0xf]
    %v92 = vld [vmem:[%s1 + $0x104] sm:$0xf]
    %v93 = vld [vmem:[%s1 + $0x108] sm:$0xf]
    %v94 = vld [vmem:[%s1 + $0x10c] sm:$0xf]
    %v95 = vld [vmem:[%s1 + $0x110] sm:$0xf]
    %v96 = vld [vmem:[%s1 + $0x114] sm:$0xf]
    %v97 = vld [vmem:[%s1 + $0x118] sm:$0xf]
    %v98 = vld [vmem:[%s1 + $0x11c] sm:$0xf]
    %v99 = vld [vmem:[%s1 + $0x120] sm:$0xf]
    %v100 = vld [vmem:[%s1 + $0x124] sm:$0xf]
    %v101 = vld [vmem:[%s1 + $0x128] sm:$0xf]
    %v102 = vld [vmem:[%s1 + $0x12c] sm:$0xf]
    %v103 = vld [vmem:[%s1 + $0x130] sm:$0xf]
    %v104 = vld [vmem:[%s1 + $0x134] sm:$0xf]
    %v105 = vld [vmem:[%s1 + $0x138] sm:$0xf]
    %v106 = vld [vmem:[%s1 + $0x13c] sm:$0xf]
    %v107 = vld [vmem:[%s1 + $0x140] sm:$0xf]
    %v108 = vld [vmem:[%s1 + $0x144] sm:$0xf]
    %v109 = vld [vmem:[%s1 + $0x148] sm:$0xf]
    %v110 = vld [vmem:[%s1 + $0x14c] sm:$0xf]
    %v111 = vld [vmem:[%s1 + $0x150] sm:$0xf]
    %v112 = vld [vmem:[%s1 + $0x154] sm:$0xf]
    %v113 = vld [vmem:[%s1 + $0x158] sm:$0xf]
    %v114 = vld [vmem:[%s1 + $0x15c] sm:$0xf]
    %v115 = vld [vmem:[%s1 + $0x160] sm:$0xf]
    %v116 = vld [vmem:[%s1 + $0x164] sm:$0xf]
    %v117 = vld [vmem:[%s1 + $0x168] sm:$0xf]
    %v118 = vld [vmem:[%s1 + $0x16c] sm:$0xf]
    %v119 = vld [vmem:[%s1 + $0x170] sm:$0xf]
    %v120 = vld [vmem:[%s1 + $0x174] sm:$0xf]
    %v121 = vld [vmem:[%s1 + $0x178] sm:$0xf]
    %v122 = vld [vmem:[%s1 + $0x17c] sm:$0xf]
    %v126 = vunpack.c.l.b16 %v24
    %v127 = vunpack.c.h.b16 %v24
    %v128 = vunpack.c.l.b16 %v25
    %v129 = vunpack.c.h.b16 %v25
    %v130 = vunpack.c.l.b16 %v26
    %v131 = vunpack.c.h.b16 %v26
    %v132 = vpack.c.b16 %v126, %v126
    %v133 = vpack.c.b16 %v127, %v127
    %v134 = vpack.c.b16 %v128, %v128
    %v135 = vpack.c.b16 %v129, %v129
    %v136 = vpack.c.b16 %v130, %v130
    %v137 = vpack.c.b16 %v131, %v131
    %v240 = vunpack.c.l.b16 %v27
    %v241 = vunpack.c.l.b16 %v28
    %v242 = vunpack.c.l.b16 %v29
    %v243 = vunpack.c.l.b16 %v30
    %v244 = vunpack.c.l.b16 %v31
    %v245 = vunpack.c.l.b16 %v32
    %v246 = vunpack.c.l.b16 %v33
    %v247 = vunpack.c.l.b16 %v34
    %v248 = vunpack.c.l.b16 %v35
    %v249 = vunpack.c.l.b16 %v36
    %v250 = vunpack.c.l.b16 %v37
    %v251 = vunpack.c.l.b16 %v38
    %v252 = vunpack.c.l.b16 %v39
    %v253 = vunpack.c.l.b16 %v40
    %v254 = vunpack.c.l.b16 %v41
    %v255 = vunpack.c.l.b16 %v42
    %v256 = vunpack.c.l.b16 %v43
    %v257 = vunpack.c.l.b16 %v44
    %v258 = vunpack.c.l.b16 %v45
    %v259 = vunpack.c.l.b16 %v46
    %v260 = vunpack.c.l.b16 %v47
    %v261 = vunpack.c.l.b16 %v48
    %v262 = vunpack.c.l.b16 %v49
    %v263 = vunpack.c.l.b16 %v50
    %v264 = vunpack.c.l.b16 %v51
    %v265 = vunpack.c.l.b16 %v52
    %v266 = vunpack.c.l.b16 %v53
    %v267 = vunpack.c.l.b16 %v54
    %v268 = vunpack.c.l.b16 %v55
    %v269 = vunpack.c.l.b16 %v56
    %v270 = vunpack.c.l.b16 %v57
    %v271 = vunpack.c.l.b16 %v58
    %v272 = vunpack.c.l.b16 %v59
    %v273 = vunpack.c.l.b16 %v60
    %v274 = vunpack.c.l.b16 %v61
    %v275 = vunpack.c.l.b16 %v62
    %v276 = vunpack.c.l.b16 %v63
    %v277 = vunpack.c.l.b16 %v64
    %v278 = vunpack.c.l.b16 %v65
    %v279 = vunpack.c.l.b16 %v66
    %v280 = vunpack.c.l.b16 %v67
    %v281 = vunpack.c.l.b16 %v68
    %v282 = vunpack.c.l.b16 %v69
    %v283 = vunpack.c.l.b16 %v70
    %v284 = vunpack.c.l.b16 %v71
    %v285 = vunpack.c.l.b16 %v72
    %v286 = vunpack.c.l.b16 %v73
    %v287 = vunpack.c.l.b16 %v74
    %v288 = vunpack.c.l.b16 %v75
    %v289 = vunpack.c.l.b16 %v76
    %v290 = vunpack.c.l.b16 %v77
    %v291 = vunpack.c.l.b16 %v78
    %v292 = vunpack.c.l.b16 %v79
    %v293 = vunpack.c.l.b16 %v80
    %v294 = vunpack.c.l.b16 %v81
    %v295 = vunpack.c.l.b16 %v82
    %v296 = vunpack.c.l.b16 %v83
    %v297 = vunpack.c.l.b16 %v84
    %v298 = vunpack.c.l.b16 %v85
    %v299 = vunpack.c.l.b16 %v86
    %v300 = vunpack.c.l.b16 %v87
    %v301 = vunpack.c.l.b16 %v88
    %v302 = vunpack.c.l.b16 %v89
    %v303 = vunpack.c.l.b16 %v90
    %v304 = vunpack.c.l.b16 %v91
    %v305 = vunpack.c.l.b16 %v92
    %v306 = vunpack.c.l.b16 %v93
    %v307 = vunpack.c.l.b16 %v94
    %v308 = vunpack.c.l.b16 %v95
    %v309 = vunpack.c.l.b16 %v96
    %v310 = vunpack.c.l.b16 %v97
    %v311 = vunpack.c.l.b16 %v98
    %v312 = vunpack.c.l.b16 %v99
    %v313 = vunpack.c.l.b16 %v100
    %v314 = vunpack.c.l.b16 %v101
    %v315 = vunpack.c.l.b16 %v102
    %v316 = vunpack.c.l.b16 %v103
    %v317 = vunpack.c.l.b16 %v104
    %v318 = vunpack.c.l.b16 %v105
    %v319 = vunpack.c.l.b16 %v106
    %v320 = vunpack.c.l.b16 %v107
    %v321 = vunpack.c.l.b16 %v108
    %v322 = vunpack.c.l.b16 %v109
    %v323 = vunpack.c.l.b16 %v110
    %v324 = vunpack.c.l.b16 %v111
    %v325 = vunpack.c.l.b16 %v112
    %v326 = vunpack.c.l.b16 %v113
    %v327 = vunpack.c.l.b16 %v114
    %v328 = vunpack.c.l.b16 %v115
    %v329 = vunpack.c.l.b16 %v116
    %v330 = vunpack.c.l.b16 %v117
    %v331 = vunpack.c.l.b16 %v118
    %v332 = vunpack.c.l.b16 %v119
    %v333 = vunpack.c.l.b16 %v120
    %v334 = vunpack.c.l.b16 %v121
    %v335 = vunpack.c.l.b16 %v122
    %v336 = vpack.c.b16 %v241, %v240
    %v337 = vpack.c.b16 %v243, %v242
    %v338 = vpack.c.b16 %v245, %v244
    %v339 = vpack.c.b16 %v247, %v246
    %v340 = vpack.c.b16 %v249, %v248
    %v341 = vpack.c.b16 %v251, %v250
    %v342 = vpack.c.b16 %v253, %v252
    %v343 = vpack.c.b16 %v255, %v254
    %v344 = vpack.c.b16 %v257, %v256
    %v345 = vpack.c.b16 %v259, %v258
    %v346 = vpack.c.b16 %v261, %v260
    %v347 = vpack.c.b16 %v263, %v262
    %v348 = vpack.c.b16 %v265, %v264
    %v349 = vpack.c.b16 %v267, %v266
    %v350 = vpack.c.b16 %v269, %v268
    %v351 = vpack.c.b16 %v271, %v270
    %v352 = vpack.c.b16 %v273, %v272
    %v353 = vpack.c.b16 %v275, %v274
    %v354 = vpack.c.b16 %v277, %v276
    %v355 = vpack.c.b16 %v279, %v278
    %v356 = vpack.c.b16 %v281, %v280
    %v357 = vpack.c.b16 %v283, %v282
    %v358 = vpack.c.b16 %v285, %v284
    %v359 = vpack.c.b16 %v287, %v286
    %v360 = vpack.c.b16 %v289, %v288
    %v361 = vpack.c.b16 %v291, %v290
    %v362 = vpack.c.b16 %v293, %v292
    %v363 = vpack.c.b16 %v295, %v294
    %v364 = vpack.c.b16 %v297, %v296
    %v365 = vpack.c.b16 %v299, %v298
    %v366 = vpack.c.b16 %v301, %v300
    %v367 = vpack.c.b16 %v303, %v302
    %v368 = vpack.c.b16 %v305, %v304
    %v369 = vpack.c.b16 %v307, %v306
    %v370 = vpack.c.b16 %v309, %v308
    %v371 = vpack.c.b16 %v311, %v310
    %v372 = vpack.c.b16 %v313, %v312
    %v373 = vpack.c.b16 %v315, %v314
    %v374 = vpack.c.b16 %v317, %v316
    %v375 = vpack.c.b16 %v319, %v318
    %v376 = vpack.c.b16 %v321, %v320
    %v377 = vpack.c.b16 %v323, %v322
    %v378 = vpack.c.b16 %v325, %v324
    %v379 = vpack.c.b16 %v327, %v326
    %v380 = vpack.c.b16 %v329, %v328
    %v381 = vpack.c.b16 %v331, %v330
    %v382 = vpack.c.b16 %v333, %v332
    %v383 = vpack.c.b16 %v335, %v334
    %432 = vmatpush.bf16.msra.mxu0 %v343
    %433 = vmatpush.bf16.msra.mxu0 %v342
    %434 = vmatpush.bf16.msra.mxu0 %v341
    %435 = vmatpush.bf16.msra.mxu0 %v340
    %436 = vmatpush.bf16.msra.mxu0 %v339
    %437 = vmatpush.bf16.msra.mxu0 %v338
    %438 = vmatpush.bf16.msra.mxu0 %v337
    %439 = vmatpush.bf16.msra.mxu0 %v336
    %440 = vmatmul.bf16.gmra.mxu0 %v132
    %v441 = vpop.f32.mrf.mxu0
    %v442 = vadd.f32 0.0, %v441
    %v443 = vpop.f32.mrf.mxu0
    %444 = vdwg.mxu0
    %445 = vmatpush.bf16.msra.mxu0 %v351
    %446 = vmatpush.bf16.msra.mxu0 %v350
    %447 = vmatpush.bf16.msra.mxu0 %v349
    %448 = vmatpush.bf16.msra.mxu0 %v348
    %449 = vmatpush.bf16.msra.mxu0 %v347
    %450 = vmatpush.bf16.msra.mxu0 %v346
    %451 = vmatpush.bf16.msra.mxu0 %v345
    %452 = vmatpush.bf16.msra.mxu0 %v344
    %453 = vmatmul.bf16.gmra.mxu0 %v133
    %v454 = vpop.f32.mrf.mxu0
    %v455 = vadd.f32 %v442, %v454
    %v456 = vpop.f32.mrf.mxu0
    %457 = vdwg.mxu0
    %458 = vmatpush.bf16.msra.mxu0 %v359
    %459 = vmatpush.bf16.msra.mxu0 %v358
    %460 = vmatpush.bf16.msra.mxu0 %v357
    %461 = vmatpush.bf16.msra.mxu0 %v356
    %462 = vmatpush.bf16.msra.mxu0 %v355
    %463 = vmatpush.bf16.msra.mxu0 %v354
    %464 = vmatpush.bf16.msra.mxu0 %v353
    %465 = vmatpush.bf16.msra.mxu0 %v352
    %466 = vmatmul.bf16.gmra.mxu0 %v134
    %v467 = vpop.f32.mrf.mxu0
    %v468 = vadd.f32 %v455, %v467
    %v469 = vpop.f32.mrf.mxu0
    %470 = vdwg.mxu0
    %471 = vmatpush.bf16.msra.mxu0 %v367
    %472 = vmatpush.bf16.msra.mxu0 %v366
    %473 = vmatpush.bf16.msra.mxu0 %v365
    %474 = vmatpush.bf16.msra.mxu0 %v364
    %475 = vmatpush.bf16.msra.mxu0 %v363
    %476 = vmatpush.bf16.msra.mxu0 %v362
    %477 = vmatpush.bf16.msra.mxu0 %v361
    %478 = vmatpush.bf16.msra.mxu0 %v360
    %479 = vmatmul.bf16.gmra.mxu0 %v135
    %v480 = vpop.f32.mrf.mxu0
    %v481 = vadd.f32 %v468, %v480
    %v482 = vpop.f32.mrf.mxu0
    %483 = vdwg.mxu0
    %484 = vmatpush.bf16.msra.mxu0 %v375
    %485 = vmatpush.bf16.msra.mxu0 %v374
    %486 = vmatpush.bf16.msra.mxu0 %v373
    %487 = vmatpush.bf16.msra.mxu0 %v372
    %488 = vmatpush.bf16.msra.mxu0 %v371
    %489 = vmatpush.bf16.msra.mxu0 %v370
    %490 = vmatpush.bf16.msra.mxu0 %v369
    %491 = vmatpush.bf16.msra.mxu0 %v368
    %492 = vmatmul.bf16.gmra.mxu0 %v136
    %v493 = vpop.f32.mrf.mxu0
    %v494 = vadd.f32 %v481, %v493
    %v495 = vpop.f32.mrf.mxu0
    %496 = vdwg.mxu0
    %497 = vmatpush.bf16.msra.mxu0 %v383
    %498 = vmatpush.bf16.msra.mxu0 %v382
    %499 = vmatpush.bf16.msra.mxu0 %v381
    %500 = vmatpush.bf16.msra.mxu0 %v380
    %501 = vmatpush.bf16.msra.mxu0 %v379
    %502 = vmatpush.bf16.msra.mxu0 %v378
    %503 = vmatpush.bf16.msra.mxu0 %v377
    %504 = vmatpush.bf16.msra.mxu0 %v376
    %505 = vmatmul.bf16.gmra.mxu0 %v137
    %v506 = vpop.f32.mrf.mxu0
    %v507 = vadd.f32 %v494, %v506
    %v508 = vpop.f32.mrf.mxu0
    %509 = vdwg.mxu0
    %v510 = vld [vmem:[%s4] sm:$0xff]
    %512 = vset.pattern.permute.xlu0 0
    %513 = vperm.xlu0 %512, %v510
    %v514 = vpop.permute.xlu0 %513
    %v516 = vmul.f32 %v507, %v514
    %v517 = vld [vmem:[%s5] sm:$0xff]
    %v518 = vld [vmem:[%s3] sm:$0x1]
    %520 = vset.pattern.permute.xlu0 0
    %521 = vperm.xlu0 %520, %v517
    %v522 = vpop.permute.xlu0 %521
    %v525 = vperm.slane %v518, 0
    %v527 = vmul.f32 %v522, %v525
    %v528 = vsub.f32 %v516, %v527
    %v529 = vld [vmem:[%s2] sm:$0x1]
    %v531 = vperm.slane %v529, 0
    %v533 = vadd.f32 %v528, %v531
    %534 = vst [vmem:[#allocation2] sm:$0xff] %v533
    // Predicated region
    $region26: #{vision_embeddings_forward.1} parent=1 // pred_check
      _
    $region27: #{vision_embeddings_forward.1} parent=1 // pred_check_branch
      %536 = sbr.rel (0) target = $region29
    $region28: #{vision_embeddings_forward.1} parent=1 // pred_region
      %538 = vsyncadd [#allocation3], 0
      %s540 = sshll.u32 [#allocation2], 4
      %s541 = int_to_ptr.vmem [resolvable:$true] %s540
      %s542 = sshll.u32 %s6, 4
      %s543 = int_to_ptr.hbm [resolvable:$true] %s542
      %545 = dma.vmem_to_hbm [thread:$0]  %s541, 128, %s543, [#allocation3]
    $region29: #{vision_embeddings_forward.1} parent=1 // pred_fallthru
      _
    // Predicated region
    $region30: #{vision_embeddings_forward.1} parent=1 // pred_check
      _
    $region31: #{vision_embeddings_forward.1} parent=1 // pred_check_branch
      %547 = sbr.rel (0) target = $region33
    $region32: #{vision_embeddings_forward.1} parent=1 // pred_region
      %549 = dma.done [#allocation3], 128
    $region33: #{vision_embeddings_forward.1} parent=1 // pred_fallthru
      _
    %550 = vsyncpa [#allocation3], 1

</llo_original>
